<compile_context>
chip_gen: v7x
topology: tpu7x:2x2x1
jax: 0.10.0
libtpu: 0.0.40
codegen_flags: <defaults>
</compile_context>

<pallas_src>
import math
import jax
import jax.numpy as jnp
from jax.experimental import pallas as pl
from jax.experimental.pallas import tpu as pltpu


# ----------------------------- Pallas kernel --------------------------------
def patch_embed_kernel(x_ref, w_ref, pe_ref, o_ref):
    """One fused GEMM + positional-embedding add per grid step.

    x_ref : (G*N, 3P) bf16   3-tap window rows for this tile (G (b,v) groups)
    w_ref : (3P, D)   bf16   concatenated conv taps (constant block)
    pe_ref: (N, D)    f32    positional embedding (constant block)
    o_ref : (G, N, D) f32
    """
    acc = jnp.dot(x_ref[...], w_ref[...],
                  preferred_element_type=jnp.float32)          # (G*N, D) f32
    g, n, d = o_ref.shape
    # n (=num_patches) is a multiple of the f32 sublane tile (8) here, so this
    # reshape is layout-preserving; the PE add broadcasts over the group axis.
    o_ref[...] = (acc.reshape(g, n, d) + pe_ref[...][None, :, :]).astype(o_ref.dtype)


def patch_embedding_pallas(x_win, w_cat, pe_n, n_groups, g_tile):
    """x_win: (M, 3P) bf16, w_cat: (3P, D) bf16, pe_n: (N, D) f32."""
    M, K = x_win.shape
    N, D = pe_n.shape
    assert M == n_groups * N
    grid = (pl.cdiv(n_groups, g_tile),)
    return pl.pallas_call(
        patch_embed_kernel,
        out_shape=jax.ShapeDtypeStruct((n_groups, N, D), jnp.float32),
        grid=grid,
        in_specs=[
            pl.BlockSpec((g_tile * N, K), lambda i: (i, 0)),
            # constant block indices -> the pipeline fetches these once
            pl.BlockSpec((K, D), lambda i: (0, 0)),
            pl.BlockSpec((N, D), lambda i: (0, 0)),
        ],
        out_specs=pl.BlockSpec((g_tile, N, D), lambda i: (i, 0, 0)),
        compiler_params=pltpu.CompilerParams(
            dimension_semantics=("parallel",)),
    )(x_win, w_cat, pe_n)


# ------------------------------- glue (JAX) ----------------------------------
def make_positional_embedding(d_model, max_len=5000):
    position = jnp.arange(max_len, dtype=jnp.float32)[:, None]
    div_term = jnp.exp(jnp.arange(0, d_model, 2, dtype=jnp.float32)
                       * (-(math.log(10000.0) / d_model)))
    pe = jnp.zeros((max_len, d_model), jnp.float32)
    pe = pe.at[:, 0::2].set(jnp.sin(position * div_term))
    pe = pe.at[:, 1::2].set(jnp.cos(position * div_term))
    return pe


def _choose_groups_per_tile(n_groups, n_patches, patch_len, d_model,
                            target_rows=4096, vmem_cap_bytes=8 << 20):
    """(b, v) groups per grid step.

    Sized so each step issues one big GEMM (~target_rows M-rows) while the
    per-step data footprint (double-buffered bf16 x block + f32 out block)
    stays under vmem_cap_bytes — comfortably inside the 32 MiB scoped VMEM
    default on every generation, including v7x (64 MiB physical).  The
    rows-per-step (g * n_patches) are kept a multiple of 8 (sublane) whenever
    the tile does not already cover all rows.
    """
    bytes_per_group = n_patches * (3 * patch_len * 2 + d_model * 4)
    cap_vmem = max(1, vmem_cap_bytes // (2 * bytes_per_group))
    cap_rows = max(1, target_rows // n_patches)
    g = max(1, min(n_groups, cap_rows, cap_vmem))
    if g < n_groups:
        align = 8 // math.gcd(n_patches, 8)
        g = max(align, (g // align) * align)
    return g


def patch_embedding_forward(x, conv_weight, pe, patch_len, stride):
    """Full PatchEmbedding.forward.

    x           : (B, n_vars, L) float32
    conv_weight : (d_model, patch_len, 3) float32  (PyTorch Conv1d layout)
    pe          : (max_len, d_model) float32
    returns (out, n_vars) with out: (B*n_vars, num_patches, d_model) float32
    """
    B, n_vars, L = x.shape
    d_model = conv_weight.shape[0]
    P = patch_len
    K = 3 * P

    # ReplicationPad1d((0, stride)); the GEMM inputs are bf16, so cast up front
    # and build the window with a single bf16 gather (one pass, no pad pass).
    x_bf = x.astype(jnp.bfloat16)
    x_pad = jnp.concatenate(
        [x_bf, jnp.repeat(x_bf[:, :, -1:], stride, axis=-1)], axis=-1)
    N = (L + stride - P) // stride + 1

    # Circular 3-tap window with the taps stacked on the lane axis:
    #   x_win[(b,v,n), k*P + p] = x_pad[b, v, ((n + k - 1) % N) * stride + p]
    n_idx = jnp.arange(N)[:, None, None]
    k_idx = jnp.arange(3)[None, :, None]
    p_idx = jnp.arange(P)[None, None, :]
    idx3 = (((n_idx + k_idx - 1) % N) * stride + p_idx).reshape(N, K)
    x_win = x_pad[:, :, idx3].reshape(B * n_vars * N, K)       # (M, 3P) bf16

    # W_cat[k*P + p, d] = conv_weight[d, p, k]  (taps stacked along K)
    w_cat = jnp.transpose(conv_weight, (2, 1, 0)).reshape(K, d_model)
    w_cat = w_cat.astype(jnp.bfloat16)
    pe_n = pe[:N].astype(jnp.float32)                          # (N, D)

    n_groups = B * n_vars
    g_tile = _choose_groups_per_tile(n_groups, N, P, d_model)
    out = patch_embedding_pallas(x_win, w_cat, pe_n, n_groups, g_tile)
    # TODO(synk): nn.Dropout is identity in eval mode; train-mode dropout not implemented.
    return out, n_vars


# ------------------------------ reference ------------------------------------
def patch_embedding_reference(x, conv_weight, pe, patch_len, stride):
    """Pure-JAX reference with the same bf16 rounding of the GEMM inputs."""
    B, n_vars, L = x.shape
    d_model = conv_weight.shape[0]
    x_pad = jnp.concatenate(
        [x, jnp.repeat(x[:, :, -1:], stride, axis=-1)], axis=-1)
    N = (L + stride - patch_len) // stride + 1
    idx = jnp.arange(N)[:, None] * stride + jnp.arange(patch_len)[None, :]
    x_unf = x_pad[:, :, idx].reshape(B * n_vars, N, patch_len)
    x_unf = x_unf.astype(jnp.bfloat16).astype(jnp.float32)
    w = conv_weight.astype(jnp.bfloat16).astype(jnp.float32)   # (D, P, 3)
    out = jnp.zeros((B * n_vars, N, d_model), jnp.float32)
    for k in range(3):
        xk = jnp.roll(x_unf, 1 - k, axis=1)                    # x[(n + k - 1) % N]
        out = out + jnp.einsum('bnp,dp->bnd', xk, w[:, :, k],
                               preferred_element_type=jnp.float32)
    return out + pe[:N][None]


# --------------------------------- main ---------------------------------------
if __name__ == "__main__":
    B, n_vars, L = 2, 4, 32
    patch_len, stride, d_model = 8, 4, 32

    key = jax.random.PRNGKey(0)
    kx, kw = jax.random.split(key)

    x = jax.random.normal(kx, (B, n_vars, L), dtype=jnp.float32)

    # Conv1d(patch_len -> d_model, kernel_size=3, bias=False), kaiming_normal_
    # (mode='fan_in', nonlinearity='leaky_relu', a=0 -> gain = sqrt(2)).
    fan_in = patch_len * 3
    std = math.sqrt(2.0 / fan_in)
    conv_weight = std * jax.random.normal(kw, (d_model, patch_len, 3),
                                          dtype=jnp.float32)

    pe = make_positional_embedding(d_model)

    out, nv = patch_embedding_forward(x, conv_weight, pe, patch_len, stride)
    out = jax.block_until_ready(out)

    num_patches = (L + stride - patch_len) // stride + 1
    ref = patch_embedding_reference(x, conv_weight, pe, patch_len, stride)

    assert out.shape == (B * n_vars, num_patches, d_model)
    assert nv == n_vars
    assert jnp.allclose(out, ref, atol=1e-3, rtol=1e-3), "mismatch vs reference"

    print("KERNEL_OK")
</pallas_src>

<mosaic_0001>
module attributes {stable_mosaic.version = 11 : i64} {
  func.func @patch_embed_kernel(%arg0: i32, %arg1: memref<64x24xbf16, #tpu.memory_space<vmem>>, %arg2: memref<24x32xbf16, #tpu.memory_space<vmem>>, %arg3: memref<8x32xf32, #tpu.memory_space<vmem>>, %arg4: memref<8x8x32xf32, #tpu.memory_space<vmem>>) attributes {dimension_semantics = [#tpu.dimension_semantics<parallel>], iteration_bounds = array<i64: 1>, scalar_prefetch = 0 : i64, scratch_operands = 0 : i64, tpu.core_type = #tpu.core_type<tc>, window_params = [{transform_indices = @transform_0, window_bounds = array<i64: 64, 24>}, {pipeline_mode = #tpu.pipeline_mode<synchronous>, transform_indices = @transform_1, window_bounds = array<i64: 24, 32>}, {pipeline_mode = #tpu.pipeline_mode<synchronous>, transform_indices = @transform_2, window_bounds = array<i64: 8, 32>}, {transform_indices = @transform_3, window_bounds = array<i64: 8, 8, 32>}]} {
    %c0 = arith.constant 0 : index
    %c0_0 = arith.constant 0 : index
    %0 = vector.load %arg1[%c0, %c0_0] : memref<64x24xbf16, #tpu.memory_space<vmem>>, vector<64x24xbf16>
    %c0_1 = arith.constant 0 : index
    %c0_2 = arith.constant 0 : index
    %1 = vector.load %arg2[%c0_1, %c0_2] : memref<24x32xbf16, #tpu.memory_space<vmem>>, vector<24x32xbf16>
    %cst = arith.constant dense<0.000000e+00> : vector<64x32xf32>
    %2 = tpu.matmul %0, %1, %cst {dimension_numbers = #tpu.dot_dimension_numbers<[1], [0], [0], [1], [0, 0, 1, 1], [], []>} : vector<64x24xbf16>, vector<24x32xbf16>, vector<64x32xf32> -> vector<64x32xf32>
    %3 = vector.shape_cast %2 : vector<64x32xf32> to vector<8x8x32xf32>
    %c0_3 = arith.constant 0 : index
    %c0_4 = arith.constant 0 : index
    %4 = vector.load %arg3[%c0_3, %c0_4] : memref<8x32xf32, #tpu.memory_space<vmem>>, vector<8x32xf32>
    %5 = vector.shape_cast %4 : vector<8x32xf32> to vector<1x8x32xf32>
    %6 = vector.broadcast %5 : vector<1x8x32xf32> to vector<8x8x32xf32>
    %7 = arith.addf %3, %6 : vector<8x8x32xf32>
    %c0_5 = arith.constant 0 : index
    %c0_6 = arith.constant 0 : index
    %c0_7 = arith.constant 0 : index
    %8 = vector.load %arg4[%c0_5, %c0_6, %c0_7] : memref<8x8x32xf32, #tpu.memory_space<vmem>>, vector<8x8x32xf32>
    tpu.vector_store %arg4[%c0_5, %c0_6, %c0_7], %7 {strides = array<i32>} : memref<8x8x32xf32, #tpu.memory_space<vmem>>, vector<8x8x32xf32>,
    return
  }
  func.func @transform_0(%arg0: i32) -> (i32, i32) {
    %c0_i32 = arith.constant 0 : i32
    %c0_i32_0 = arith.constant 0 : i32
    return %arg0, %c0_i32 : i32, i32
  }
  func.func @transform_1(%arg0: i32) -> (i32, i32) {
    %c0_i32 = arith.constant 0 : i32
    %c0_i32_0 = arith.constant 0 : i32
    %c0_i32_1 = arith.constant 0 : i32
    return %c0_i32, %c0_i32_0 : i32, i32
  }
  func.func @transform_2(%arg0: i32) -> (i32, i32) {
    %c0_i32 = arith.constant 0 : i32
    %c0_i32_0 = arith.constant 0 : i32
    %c0_i32_1 = arith.constant 0 : i32
    return %c0_i32, %c0_i32_0 : i32, i32
  }
  func.func @transform_3(%arg0: i32) -> (i32, i32, i32) {
    %c0_i32 = arith.constant 0 : i32
    %c0_i32_0 = arith.constant 0 : i32
    %c0_i32_1 = arith.constant 0 : i32
    return %arg0, %c0_i32, %c0_i32_0 : i32, i32, i32
  }
}

</mosaic_0001>

<llo_original>
// kernel: tpu_custom_call.1
$region0: #{tpu_custom_call.1}
  #allocation0 [shape = 'u32[]', space=smem, size = 0x4, offset = 0x4, fixed_abs, tag = 'smem constant byte address 0x4 - core index']
  #allocation1 [shape = 'u32[144,128]{1,0:T(1,128)}', space=vmem, size = 0x12000, scoped, tag = 'internal scratch']
  %s0 = inlined_call_operand.vmem [shape: bf16[64,24], index: 0, kind: input, shape index: {}]
  %s1 = inlined_call_operand.vmem [shape: bf16[24,32], index: 1, kind: input, shape index: {}]
  %s2 = inlined_call_operand.vmem [shape: f32[8,32], index: 2, kind: input, shape index: {}]
  %s3 = inlined_call_operand.hbm [shape: f32[8,8,32], index: 3, kind: output, shape index: {}]
  %s4 = sld [smem:[#allocation0]]
  $region22: #{tpu_custom_call.1} parent=0
    _
  %s6 = ssub.s32 1, %s4
  %s7 = scalar_select 0, %s6, %s4
  $region1: #{tpu_custom_call.1} parent=0
    #allocation2 [shape = 'u8[32768]{0}', space=vmem, size = 0x8000, scoped, tag = 'output window, operand 0, single buffered']
    #allocation3 [shape = 's32[1]{0}', space=sflag, size = 0x4, scoped, tag = 'scoped memory for tpu_custom_call.1']
    %8 = vsyncpa [#allocation3], 0
    // Predicated region
    $region2: #{tpu_custom_call.1} parent=1 // pred_check
      _
    $region3: #{tpu_custom_call.1} parent=1 // pred_check_branch
      %10 = sbr.rel (0) target = $region5
    $region4: #{tpu_custom_call.1} parent=1 // pred_region
      _
    $region5: #{tpu_custom_call.1} parent=1 // pred_fallthru
      _
    // Predicated region
    $region6: #{tpu_custom_call.1} parent=1 // pred_check
      _
    $region7: #{tpu_custom_call.1} parent=1 // pred_check_branch
      %12 = sbr.rel (0) target = $region9
    $region8: #{tpu_custom_call.1} parent=1 // pred_region
      _
    $region9: #{tpu_custom_call.1} parent=1 // pred_fallthru
      _
    // Predicated region
    $region10: #{tpu_custom_call.1} parent=1 // pred_check
      _
    $region11: #{tpu_custom_call.1} parent=1 // pred_check_branch
      %14 = sbr.rel (0) target = $region13
    $region12: #{tpu_custom_call.1} parent=1 // pred_region
      _
    $region13: #{tpu_custom_call.1} parent=1 // pred_fallthru
      _
    %v16 = vld [vmem:[%s0] sm:$0xf]
    %v17 = vld [vmem:[%s0 + $0x4] sm:$0xf]
    %v18 = vld [vmem:[%s0 + $0x8] sm:$0xf]
    %v19 = vld [vmem:[%s0 + $0xc] sm:$0xf]
    %v20 = vld [vmem:[%s0 + $0x10] sm:$0xf]
    %v21 = vld [vmem:[%s0 + $0x14] sm:$0xf]
    %v22 = vld [vmem:[%s0 + $0x18] sm:$0xf]
    %v23 = vld [vmem:[%s0 + $0x1c] sm:$0xf]
    %v24 = vld [vmem:[%s1] sm:$0xf]
    %v25 = vld [vmem:[%s1 + $0x4] sm:$0xf]
    %v26 = vld [vmem:[%s1 + $0x8] sm:$0xf]
    %v35 = vunpack.c.l.b16 %v16
    %v36 = vunpack.c.l.b16 %v17
    %v37 = vunpack.c.l.b16 %v18
    %v38 = vunpack.c.l.b16 %v19
    %v39 = vunpack.c.l.b16 %v20
    %v40 = vunpack.c.l.b16 %v21
    %v41 = vunpack.c.l.b16 %v22
    %v42 = vunpack.c.l.b16 %v23
    %v43 = vpack.c.b16 %v36, %v35
    %v44 = vpack.c.b16 %v38, %v37
    %v45 = vpack.c.b16 %v40, %v39
    %v46 = vpack.c.b16 %v42, %v41
    %v50 = vunpack.c.l.b16 %v24
    %v51 = vunpack.c.l.b16 %v25
    %v52 = vunpack.c.l.b16 %v26
    %v53 = vpack.c.b16 %v51, %v50
    %v54 = vpack.c.b16 %v52, %v52
    %vm56 = vcmask 195584
    %v58 = vsel %vm56, %v43, 0
    %v61 = vsel %vm56, %v44, 0
    %v64 = vsel %vm56, %v45, 0
    %v67 = vsel %vm56, %v46, 0
    %vm69 = vcmask 1043456
    %v71 = vsel %vm69, %v54, 0
    %73 = vmatprep.subr.bf16.mxu0 0
    %74 = vmatpush1.bf16.msra.mxu0 %v53
    %75 = vmatprep.subr.bf16.mxu0 0
    %76 = vmatpush1.bf16.msra.mxu0 %v71
    %77 = vmatprep.subr.bf16.mxu0 0
    %78 = vmatpush1.bf16.msra.mxu0 0
    %79 = vmatprep.subr.bf16.mxu0 0
    %80 = vmatpush1.bf16.msra.mxu0 0
    %81 = vmatprep.subr.bf16.mxu0 0
    %82 = vmatpush1.bf16.msra.mxu0 0
    %83 = vmatprep.subr.bf16.mxu0 0
    %84 = vmatpush1.bf16.msra.mxu0 0
    %85 = vmatprep.subr.bf16.mxu0 0
    %86 = vmatpush1.bf16.msra.mxu0 0
    %87 = vmatprep.subr.bf16.mxu0 0
    %88 = vmatpush1.bf16.msra.mxu0 0
    %89 = vmatprep.subr.bf16.mxu0 0
    %90 = vmatpush1.bf16.msra.mxu0 0
    %91 = vmatprep.subr.bf16.mxu0 0
    %92 = vmatpush1.bf16.msra.mxu0 0
    %93 = vmatprep.subr.bf16.mxu0 0
    %94 = vmatpush1.bf16.msra.mxu0 0
    %95 = vmatprep.subr.bf16.mxu0 0
    %96 = vmatpush1.bf16.msra.mxu0 0
    %97 = vmatprep.subr.bf16.mxu0 0
    %98 = vmatpush1.bf16.msra.mxu0 0
    %99 = vmatprep.subr.bf16.mxu0 0
    %100 = vmatpush1.bf16.msra.mxu0 0
    %101 = vmatprep.subr.bf16.mxu0 0
    %102 = vmatpush1.bf16.msra.mxu0 0
    %103 = vmatprep.subr.bf16.mxu0 0
    %104 = vmatpush1.bf16.msra.mxu0 0
    %105 = vmatprep.mubr.bf16.mxu0 0
    %106 = vmatmul.mubr.bf16.gmra.mrb[0].mxu0 %v58
    %v107 = vpop.f32.mrb[0].mxu0
    %v108 = vadd.f32 0.0, %v107
    %v109 = vpop.f32.mrb[0].mxu0
    %v110 = vpop.f32.mrb[0].mxu0
    %v111 = vadd.f32 0.0, %v110
    %v112 = vpop.f32.mrb[0].mxu0
    %113 = vmatprep.mubr.bf16.mxu0 0
    %114 = vmatmul.mubr.bf16.gmra.mrb[0].mxu0 %v61
    %v115 = vpop.f32.mrb[0].mxu0
    %v116 = vadd.f32 0.0, %v115
    %v117 = vpop.f32.mrb[0].mxu0
    %v118 = vpop.f32.mrb[0].mxu0
    %v119 = vadd.f32 0.0, %v118
    %v120 = vpop.f32.mrb[0].mxu0
    %121 = vmatprep.mubr.bf16.mxu0 0
    %122 = vmatmul.mubr.bf16.gmra.mrb[0].mxu0 %v64
    %v123 = vpop.f32.mrb[0].mxu0
    %v124 = vadd.f32 0.0, %v123
    %v125 = vpop.f32.mrb[0].mxu0
    %v126 = vpop.f32.mrb[0].mxu0
    %v127 = vadd.f32 0.0, %v126
    %v128 = vpop.f32.mrb[0].mxu0
    %129 = vmatprep.mubr.bf16.mxu0 0
    %130 = vmatmul.mubr.bf16.gmra.mrb[0].mxu0 %v67
    %v131 = vpop.f32.mrb[0].mxu0
    %v132 = vadd.f32 0.0, %v131
    %v133 = vpop.f32.mrb[0].mxu0
    %v134 = vpop.f32.mrb[0].mxu0
    %v135 = vadd.f32 0.0, %v134
    %v136 = vpop.f32.mrb[0].mxu0
    %137 = vdwg.mxu0
    %v138 = vld [vmem:[%s2] sm:$0xff]
    %v139 = vadd.f32 %v108, %v138
    %v140 = vadd.f32 %v111, %v138
    %v141 = vadd.f32 %v116, %v138
    %v142 = vadd.f32 %v119, %v138
    %v143 = vadd.f32 %v124, %v138
    %v144 = vadd.f32 %v127, %v138
    %v145 = vadd.f32 %v132, %v138
    %v146 = vadd.f32 %v135, %v138
    %vm147 = vcmask 261120
    %148 = vst.msk [vmem:[#allocation2] sm:$0xff] %vm147, %v139
    %149 = vst.msk [vmem:[#allocation2 + $0x8] sm:$0xff] %vm147, %v140
    %150 = vst.msk [vmem:[#allocation2 + $0x10] sm:$0xff] %vm147, %v141
    %151 = vst.msk [vmem:[#allocation2 + $0x18] sm:$0xff] %vm147, %v142
    %152 = vst.msk [vmem:[#allocation2 + $0x20] sm:$0xff] %vm147, %v143
    %153 = vst.msk [vmem:[#allocation2 + $0x28] sm:$0xff] %vm147, %v144
    %154 = vst.msk [vmem:[#allocation2 + $0x30] sm:$0xff] %vm147, %v145
    %155 = vst.msk [vmem:[#allocation2 + $0x38] sm:$0xff] %vm147, %v146
    // Predicated region
    $region14: #{tpu_custom_call.1} parent=1 // pred_check
      _
    $region15: #{tpu_custom_call.1} parent=1 // pred_check_branch
      %157 = sbr.rel (0) target = $region17
    $region16: #{tpu_custom_call.1} parent=1 // pred_region
      %s159 = ssub.s32 1024, 1024
      %160 = vsyncadd [#allocation3], %s159
      %s161 = sshll.u32 [#allocation2], 4
      %s162 = int_to_ptr.vmem [resolvable:$true] %s161
      %167 = dma.vmem_to_hbm [thread:$0]  %s162, 1024, %s3, [#allocation3], 128, 128, 8
    $region17: #{tpu_custom_call.1} parent=1 // pred_fallthru
      _
    // Predicated region
    $region18: #{tpu_custom_call.1} parent=1 // pred_check
      _
    $region19: #{tpu_custom_call.1} parent=1 // pred_check_branch
      %169 = sbr.rel (0) target = $region21
    $region20: #{tpu_custom_call.1} parent=1 // pred_region
      %170 = dma.done [#allocation3], 1024
    $region21: #{tpu_custom_call.1} parent=1 // pred_fallthru
      _
    %171 = vsyncpa [#allocation3], 1

</llo_original>
